<compile_context>
chip_gen: v5e
topology: v5e:2x2
jax: 0.10.0
libtpu: 0.0.40
codegen_flags: <defaults>
</compile_context>

<pallas_src>
import jax
import jax.numpy as jnp
from jax.experimental import pallas as pl
from jax.experimental.pallas import tpu as pltpu

# ----------------------------- model hyperparams (small, synthetic) -----------------------------
B, C_IN, H, W = 2, 4, 16, 16           # images: (B, C_IN, H, W)  NCHW
HW = H * W                             # 256 pixels per image (lane axis in-kernel)
DATA_DIM = 32                          # backbone feature dim ("data_dim" in reconstruct_direct)
PQ_M = 4                               # number of PQ subquantizers
PQ_DSUB = DATA_DIM // PQ_M             # sub-vector dim per subquantizer
PQ_K = 16                              # centroids per subquantizer
NUM_CLASSES = 10
PAD_CLASSES = 128                      # lane-dense output width; sliced to NUM_CLASSES in wrapper

# packed-parameter column layout (single (64, PACK_W) operand)
WP_OFF = 0                             # [:, 0:128]   W' = (Cblk @ fw_pad)/HW + fb_pad/(M*HW)
CBLK_OFF = WP_OFF + PAD_CLASSES        # [:, 128:160] block-diagonal centroids (64, 32)
GW_OFF = CBLK_OFF + DATA_DIM           # [0:32, 160:164] conv weight transposed (D, Cin)
GB_OFF = GW_OFF + C_IN                 # [0:32, 164:165] conv bias (D, 1)
NHC_OFF = GB_OFF + 1                   # [:, 165:166] -||centroid||^2 / 2  (64, 1)
PACK_W = NHC_OFF + 1                   # 166


# ------------------------------------- fused forward kernel -------------------------------------
def _fused_kernel(img_ref, pack_ref, o_ref):
    # img_ref : (1, Cin, HW)          one image; channels on sublanes, pixels on lanes
    # pack_ref: (M*K, PACK_W)         packed weights (see prepare_params)
    # o_ref   : (1, 8, PAD_CLASSES)   lane-dense padded logits (row 0 is the real row)

    wp = pack_ref[:, WP_OFF:WP_OFF + PAD_CLASSES]          # (64, 128) fused decode+pool+head
    cblk = pack_ref[:, CBLK_OFF:CBLK_OFF + DATA_DIM]       # (64, 32)  block-diag centroids
    gwT = pack_ref[0:DATA_DIM, GW_OFF:GW_OFF + C_IN]       # (32, 4)   1x1-conv weight (D, Cin)
    gbT = pack_ref[0:DATA_DIM, GB_OFF:GB_OFF + 1]          # (32, 1)   conv bias
    nhc = pack_ref[:, NHC_OFF:NHC_OFF + 1]                 # (64, 1)   -||centroid||^2 / 2

    img = img_ref[0]                                       # (Cin, HW) = (4, 256)

    # ---- g_model: 1x1 conv (Cin -> D) + ReLU as Cin=4 VPU FMAs; pixels stay lane-dense -------
    acc = jnp.broadcast_to(gbT, (DATA_DIM, HW))            # (32, 256)
    for c in range(C_IN):                                  # static, Cin = 4
        acc = acc + gwT[:, c:c + 1] * img[c:c + 1, :]
    featT = jnp.maximum(acc, 0.0)                          # (32, 256)

    # ---- PQ encode: per-subspace nearest centroid ---------------------------------------------
    # score[mk, n] = <x_n, c_mk> - ||c_mk||^2/2 ; argmax(score) == argmin(squared distance).
    # (||x_n||^2 is constant within a subspace group, so dropping it is argmin-equivalent.)
    score = jnp.dot(cblk, featT, preferred_element_type=jnp.float32) + nhc   # (64, 256)

    row16 = jax.lax.broadcasted_iota(jnp.int32, (PQ_K, HW), 0)               # (16, 256)
    logits = jnp.zeros((1, PAD_CLASSES), jnp.float32)
    for m in range(PQ_M):                                  # static, M = 4
        s = score[m * PQ_K:(m + 1) * PQ_K, :]              # (16, 256)
        best = jnp.max(s, axis=0, keepdims=True)           # (1, 256)   sublane reduce (XLU)
        # first-index tie-break (matches the reference argmin behaviour)
        idx = jnp.min(jnp.where(s == best, row16, PQ_K), axis=0, keepdims=True)  # (1, 256)
        onehot = (row16 == idx).astype(jnp.float32)        # (16, 256)  one compare per subspace
        counts = jnp.sum(onehot, axis=1, keepdims=True)    # (16, 1)    per-centroid pixel counts
        # fused decode + avg-pool + classifier: counts @ W'  (tiny VPU mult + sublane reduce)
        logits = logits + jnp.sum(counts * wp[m * PQ_K:(m + 1) * PQ_K, :],
                                  axis=0, keepdims=True)   # (1, 128)

    o_ref[0] = jnp.broadcast_to(logits, (8, PAD_CLASSES))  # padded, unmasked lane-dense store


# -------------------------------------- wrapper / plumbing --------------------------------------
def prepare_params(g_w, g_b, pq_centroids, f_w, f_b):
    """Weight-only preparation. Call ONCE; the result is reused for every forward call."""
    # block-diagonal centroid matrix: subquantizer m's centroids live in column block m
    eye = jnp.eye(PQ_M, dtype=jnp.float32)
    cblk = (pq_centroids[:, :, None, :] * eye[:, None, :, None]).reshape(PQ_M * PQ_K, DATA_DIM)
    csq = jnp.sum(cblk * cblk, axis=1)                                     # (64,)

    # fold decode + avg-pool + linear head into one matrix:
    #   logits = counts @ [(cblk @ fw)/HW + fb/(M*HW)]   (sum(counts) == M*HW per image)
    fw_pad = jnp.zeros((DATA_DIM, PAD_CLASSES), jnp.float32).at[:, :NUM_CLASSES].set(f_w)
    fb_pad = jnp.zeros((PAD_CLASSES,), jnp.float32).at[:NUM_CLASSES].set(f_b[0])
    wp = (cblk @ fw_pad) / HW + fb_pad[None, :] / (PQ_M * HW)              # (64, 128)

    pack = jnp.zeros((PQ_M * PQ_K, PACK_W), jnp.float32)
    pack = pack.at[:, WP_OFF:WP_OFF + PAD_CLASSES].set(wp)
    pack = pack.at[:, CBLK_OFF:CBLK_OFF + DATA_DIM].set(cblk)
    pack = pack.at[0:DATA_DIM, GW_OFF:GW_OFF + C_IN].set(g_w.T)
    pack = pack.at[0:DATA_DIM, GB_OFF:GB_OFF + 1].set(g_b.T)
    pack = pack.at[:, NHC_OFF:NHC_OFF + 1].set((-0.5 * csq)[:, None])
    return pack


@jax.jit
def backbone_eval_forward(images, pack):
    # images stay NCHW; only a free reshape to (B, Cin, H*W) — no transpose op in the call path.
    img = images.reshape(B, C_IN, HW)
    out_pad = pl.pallas_call(
        _fused_kernel,
        out_shape=jax.ShapeDtypeStruct((B, 8, PAD_CLASSES), jnp.float32),
        grid_spec=pltpu.PrefetchScalarGridSpec(
            num_scalar_prefetch=0,
            grid=(B,),
            in_specs=[
                pl.BlockSpec((1, C_IN, HW), lambda b: (b, 0, 0)),
                pl.BlockSpec((PQ_M * PQ_K, PACK_W), lambda b: (0, 0)),   # resident weights
            ],
            out_specs=pl.BlockSpec((1, 8, PAD_CLASSES), lambda b: (b, 0, 0)),
        ),
        compiler_params=pltpu.CompilerParams(dimension_semantics=("parallel",)),
    )(img, pack)
    return out_pad[:, 0, :NUM_CLASSES]
    # TODO(synk): g_model/f_model in the original are arbitrary torch backbones and pq_model is a
    # faiss ProductQuantizer; here they are fixed synthetic stand-ins (1x1-conv+ReLU backbone,
    # avg-pool+linear head, exact block-diagonal PQ encode/decode) with deterministic init.


if __name__ == "__main__":
    key = jax.random.PRNGKey(0)
    k_img, k_gw, k_gb, k_cent, k_fw, k_fb = jax.random.split(key, 6)

    images = jax.random.normal(k_img, (B, C_IN, H, W), dtype=jnp.float32)

    # deterministic parameter init
    g_w = 0.1 * jax.random.normal(k_gw, (C_IN, DATA_DIM), dtype=jnp.float32)
    g_b = 0.01 * jax.random.normal(k_gb, (1, DATA_DIM), dtype=jnp.float32)
    pq_centroids = jax.random.normal(k_cent, (PQ_M, PQ_K, PQ_DSUB), dtype=jnp.float32)
    f_w = 0.1 * jax.random.normal(k_fw, (DATA_DIM, NUM_CLASSES), dtype=jnp.float32)
    f_b = 0.01 * jax.random.normal(k_fb, (1, NUM_CLASSES), dtype=jnp.float32)

    # weight-only prep is hoisted out of the per-call path (done once, reused every call)
    pack = prepare_params(g_w, g_b, pq_centroids, f_w, f_b)

    out = backbone_eval_forward(images, pack)
    out = jax.block_until_ready(out)

    assert out.shape == (B, NUM_CLASSES)
    assert bool(jnp.all(jnp.isfinite(out)))
    print("KERNEL_OK")
</pallas_src>

<mosaic_0001>
module attributes {stable_mosaic.version = 11 : i64} {
  func.func @_fused_kernel(%arg0: i32, %arg1: memref<1x4x256xf32, #tpu.memory_space<vmem>>, %arg2: memref<64x166xf32, #tpu.memory_space<vmem>>, %arg3: memref<1x8x128xf32, #tpu.memory_space<vmem>>) attributes {dimension_semantics = [#tpu.dimension_semantics<parallel>], iteration_bounds = array<i64: 2>, scalar_prefetch = 0 : i64, scratch_operands = 0 : i64, tpu.core_type = #tpu.core_type<tc>, window_params = [{transform_indices = @transform_0, window_bounds = array<i64: 1, 4, 256>}, {pipeline_mode = #tpu.pipeline_mode<synchronous>, transform_indices = @transform_1, window_bounds = array<i64: 64, 166>}, {transform_indices = @transform_2, window_bounds = array<i64: 1, 8, 128>}]} {
    %c0 = arith.constant 0 : index
    %c0_0 = arith.constant 0 : index
    %0 = vector.load %arg2[%c0, %c0_0] : memref<64x166xf32, #tpu.memory_space<vmem>>, vector<64x128xf32>
    %c0_1 = arith.constant 0 : index
    %c128 = arith.constant 128 : index
    %1 = vector.load %arg2[%c0_1, %c128] : memref<64x166xf32, #tpu.memory_space<vmem>>, vector<64x32xf32>
    %c0_2 = arith.constant 0 : index
    %c160 = arith.constant 160 : index
    %2 = vector.load %arg2[%c0_2, %c160] : memref<64x166xf32, #tpu.memory_space<vmem>>, vector<32x4xf32>
    %c0_3 = arith.constant 0 : index
    %c164 = arith.constant 164 : index
    %3 = vector.load %arg2[%c0_3, %c164] : memref<64x166xf32, #tpu.memory_space<vmem>>, vector<32x1xf32>
    %c0_4 = arith.constant 0 : index
    %c165 = arith.constant 165 : index
    %4 = vector.load %arg2[%c0_4, %c165] : memref<64x166xf32, #tpu.memory_space<vmem>>, vector<64x1xf32>
    %c0_5 = arith.constant 0 : index
    %c0_6 = arith.constant 0 : index
    %c0_7 = arith.constant 0 : index
    %5 = vector.load %arg1[%c0_5, %c0_6, %c0_7] : memref<1x4x256xf32, #tpu.memory_space<vmem>>, vector<1x4x256xf32>
    %6 = vector.shape_cast %5 : vector<1x4x256xf32> to vector<4x256xf32>
    %7 = vector.shape_cast %3 : vector<32x1xf32> to vector<32x1xf32>
    %8 = vector.broadcast %7 : vector<32x1xf32> to vector<32x256xf32>
    %9 = vector.extract_strided_slice %2 {offsets = [0, 0], sizes = [32, 1], strides = [1, 1]} : vector<32x4xf32> to vector<32x1xf32>
    %10 = vector.extract_strided_slice %6 {offsets = [0, 0], sizes = [1, 256], strides = [1, 1]} : vector<4x256xf32> to vector<1x256xf32>
    %11 = vector.broadcast %9 : vector<32x1xf32> to vector<32x256xf32>
    %12 = vector.broadcast %10 : vector<1x256xf32> to vector<32x256xf32>
    %13 = arith.mulf %11, %12 : vector<32x256xf32>
    %14 = arith.addf %8, %13 : vector<32x256xf32>
    %15 = vector.extract_strided_slice %2 {offsets = [0, 1], sizes = [32, 1], strides = [1, 1]} : vector<32x4xf32> to vector<32x1xf32>
    %16 = vector.extract_strided_slice %6 {offsets = [1, 0], sizes = [1, 256], strides = [1, 1]} : vector<4x256xf32> to vector<1x256xf32>
    %17 = vector.broadcast %15 : vector<32x1xf32> to vector<32x256xf32>
    %18 = vector.broadcast %16 : vector<1x256xf32> to vector<32x256xf32>
    %19 = arith.mulf %17, %18 : vector<32x256xf32>
    %20 = arith.addf %14, %19 : vector<32x256xf32>
    %21 = vector.extract_strided_slice %2 {offsets = [0, 2], sizes = [32, 1], strides = [1, 1]} : vector<32x4xf32> to vector<32x1xf32>
    %22 = vector.extract_strided_slice %6 {offsets = [2, 0], sizes = [1, 256], strides = [1, 1]} : vector<4x256xf32> to vector<1x256xf32>
    %23 = vector.broadcast %21 : vector<32x1xf32> to vector<32x256xf32>
    %24 = vector.broadcast %22 : vector<1x256xf32> to vector<32x256xf32>
    %25 = arith.mulf %23, %24 : vector<32x256xf32>
    %26 = arith.addf %20, %25 : vector<32x256xf32>
    %27 = vector.extract_strided_slice %2 {offsets = [0, 3], sizes = [32, 1], strides = [1, 1]} : vector<32x4xf32> to vector<32x1xf32>
    %28 = vector.extract_strided_slice %6 {offsets = [3, 0], sizes = [1, 256], strides = [1, 1]} : vector<4x256xf32> to vector<1x256xf32>
    %29 = vector.broadcast %27 : vector<32x1xf32> to vector<32x256xf32>
    %30 = vector.broadcast %28 : vector<1x256xf32> to vector<32x256xf32>
    %31 = arith.mulf %29, %30 : vector<32x256xf32>
    %32 = arith.addf %26, %31 : vector<32x256xf32>
    %cst = arith.constant 0.000000e+00 : f32
    %33 = vector.broadcast %cst : f32 to vector<32x256xf32>
    %34 = arith.maximumf %32, %33 : vector<32x256xf32>
    %cst_8 = arith.constant dense<0.000000e+00> : vector<64x256xf32>
    %35 = tpu.matmul %1, %34, %cst_8 {dimension_numbers = #tpu.dot_dimension_numbers<[1], [0], [0], [1], [0, 0, 1, 1], [], []>} : vector<64x32xf32>, vector<32x256xf32>, vector<64x256xf32> -> vector<64x256xf32>
    %36 = vector.broadcast %4 : vector<64x1xf32> to vector<64x256xf32>
    %37 = arith.addf %35, %36 : vector<64x256xf32>
    %38 = tpu.iota {dimensions = array<i32: 0>} : vector<16x256xi32>
    %cst_9 = arith.constant 0.000000e+00 : f32
    %39 = vector.broadcast %cst_9 : f32 to vector<1x128xf32>
    %40 = vector.extract_strided_slice %37 {offsets = [0, 0], sizes = [16, 256], strides = [1, 1]} : vector<64x256xf32> to vector<16x256xf32>
    %cst_10 = arith.constant dense<0xFF800000> : vector<256xf32>
    %41 = vector.multi_reduction <maximumf>, %40, %cst_10 [0] : vector<16x256xf32> to vector<256xf32>
    %42 = vector.shape_cast %41 : vector<256xf32> to vector<1x256xf32>
    %43 = vector.broadcast %42 : vector<1x256xf32> to vector<16x256xf32>
    %44 = arith.cmpf oeq, %40, %43 : vector<16x256xf32>
    %c16_i32 = arith.constant 16 : i32
    %45 = vector.broadcast %c16_i32 : i32 to vector<16x256xi32>
    %46 = arith.select %44, %38, %45 : vector<16x256xi1>, vector<16x256xi32>
    %cst_11 = arith.constant dense<2147483647> : vector<256xi32>
    %47 = vector.multi_reduction <minsi>, %46, %cst_11 [0] : vector<16x256xi32> to vector<256xi32>
    %48 = vector.shape_cast %47 : vector<256xi32> to vector<1x256xi32>
    %49 = vector.broadcast %48 : vector<1x256xi32> to vector<16x256xi32>
    %50 = arith.cmpi eq, %38, %49 : vector<16x256xi32>
    %51 = arith.extui %50 : vector<16x256xi1> to vector<16x256xi32>
    %52 = arith.sitofp %51 : vector<16x256xi32> to vector<16x256xf32>
    %cst_12 = arith.constant dense<0.000000e+00> : vector<16xf32>
    %53 = vector.multi_reduction <add>, %52, %cst_12 [1] : vector<16x256xf32> to vector<16xf32>
    %54 = vector.shape_cast %53 : vector<16xf32> to vector<16x1xf32>
    %55 = vector.extract_strided_slice %0 {offsets = [0, 0], sizes = [16, 128], strides = [1, 1]} : vector<64x128xf32> to vector<16x128xf32>
    %56 = vector.broadcast %54 : vector<16x1xf32> to vector<16x128xf32>
    %57 = arith.mulf %56, %55 : vector<16x128xf32>
    %cst_13 = arith.constant dense<0.000000e+00> : vector<128xf32>
    %58 = vector.multi_reduction <add>, %57, %cst_13 [0] : vector<16x128xf32> to vector<128xf32>
    %59 = vector.shape_cast %58 : vector<128xf32> to vector<1x128xf32>
    %60 = arith.addf %39, %59 : vector<1x128xf32>
    %61 = vector.extract_strided_slice %37 {offsets = [16, 0], sizes = [16, 256], strides = [1, 1]} : vector<64x256xf32> to vector<16x256xf32>
    %cst_14 = arith.constant dense<0xFF800000> : vector<256xf32>
    %62 = vector.multi_reduction <maximumf>, %61, %cst_14 [0] : vector<16x256xf32> to vector<256xf32>
    %63 = vector.shape_cast %62 : vector<256xf32> to vector<1x256xf32>
    %64 = vector.broadcast %63 : vector<1x256xf32> to vector<16x256xf32>
    %65 = arith.cmpf oeq, %61, %64 : vector<16x256xf32>
    %c16_i32_15 = arith.constant 16 : i32
    %66 = vector.broadcast %c16_i32_15 : i32 to vector<16x256xi32>
    %67 = arith.select %65, %38, %66 : vector<16x256xi1>, vector<16x256xi32>
    %cst_16 = arith.constant dense<2147483647> : vector<256xi32>
    %68 = vector.multi_reduction <minsi>, %67, %cst_16 [0] : vector<16x256xi32> to vector<256xi32>
    %69 = vector.shape_cast %68 : vector<256xi32> to vector<1x256xi32>
    %70 = vector.broadcast %69 : vector<1x256xi32> to vector<16x256xi32>
    %71 = arith.cmpi eq, %38, %70 : vector<16x256xi32>
    %72 = arith.extui %71 : vector<16x256xi1> to vector<16x256xi32>
    %73 = arith.sitofp %72 : vector<16x256xi32> to vector<16x256xf32>
    %cst_17 = arith.constant dense<0.000000e+00> : vector<16xf32>
    %74 = vector.multi_reduction <add>, %73, %cst_17 [1] : vector<16x256xf32> to vector<16xf32>
    %75 = vector.shape_cast %74 : vector<16xf32> to vector<16x1xf32>
    %76 = vector.extract_strided_slice %0 {offsets = [16, 0], sizes = [16, 128], strides = [1, 1]} : vector<64x128xf32> to vector<16x128xf32>
    %77 = vector.broadcast %75 : vector<16x1xf32> to vector<16x128xf32>
    %78 = arith.mulf %77, %76 : vector<16x128xf32>
    %cst_18 = arith.constant dense<0.000000e+00> : vector<128xf32>
    %79 = vector.multi_reduction <add>, %78, %cst_18 [0] : vector<16x128xf32> to vector<128xf32>
    %80 = vector.shape_cast %79 : vector<128xf32> to vector<1x128xf32>
    %81 = arith.addf %60, %80 : vector<1x128xf32>
    %82 = vector.extract_strided_slice %37 {offsets = [32, 0], sizes = [16, 256], strides = [1, 1]} : vector<64x256xf32> to vector<16x256xf32>
    %cst_19 = arith.constant dense<0xFF800000> : vector<256xf32>
    %83 = vector.multi_reduction <maximumf>, %82, %cst_19 [0] : vector<16x256xf32> to vector<256xf32>
    %84 = vector.shape_cast %83 : vector<256xf32> to vector<1x256xf32>
    %85 = vector.broadcast %84 : vector<1x256xf32> to vector<16x256xf32>
    %86 = arith.cmpf oeq, %82, %85 : vector<16x256xf32>
    %c16_i32_20 = arith.constant 16 : i32
    %87 = vector.broadcast %c16_i32_20 : i32 to vector<16x256xi32>
    %88 = arith.select %86, %38, %87 : vector<16x256xi1>, vector<16x256xi32>
    %cst_21 = arith.constant dense<2147483647> : vector<256xi32>
    %89 = vector.multi_reduction <minsi>, %88, %cst_21 [0] : vector<16x256xi32> to vector<256xi32>
    %90 = vector.shape_cast %89 : vector<256xi32> to vector<1x256xi32>
    %91 = vector.broadcast %90 : vector<1x256xi32> to vector<16x256xi32>
    %92 = arith.cmpi eq, %38, %91 : vector<16x256xi32>
    %93 = arith.extui %92 : vector<16x256xi1> to vector<16x256xi32>
    %94 = arith.sitofp %93 : vector<16x256xi32> to vector<16x256xf32>
    %cst_22 = arith.constant dense<0.000000e+00> : vector<16xf32>
    %95 = vector.multi_reduction <add>, %94, %cst_22 [1] : vector<16x256xf32> to vector<16xf32>
    %96 = vector.shape_cast %95 : vector<16xf32> to vector<16x1xf32>
    %97 = vector.extract_strided_slice %0 {offsets = [32, 0], sizes = [16, 128], strides = [1, 1]} : vector<64x128xf32> to vector<16x128xf32>
    %98 = vector.broadcast %96 : vector<16x1xf32> to vector<16x128xf32>
    %99 = arith.mulf %98, %97 : vector<16x128xf32>
    %cst_23 = arith.constant dense<0.000000e+00> : vector<128xf32>
    %100 = vector.multi_reduction <add>, %99, %cst_23 [0] : vector<16x128xf32> to vector<128xf32>
    %101 = vector.shape_cast %100 : vector<128xf32> to vector<1x128xf32>
    %102 = arith.addf %81, %101 : vector<1x128xf32>
    %103 = vector.extract_strided_slice %37 {offsets = [48, 0], sizes = [16, 256], strides = [1, 1]} : vector<64x256xf32> to vector<16x256xf32>
    %cst_24 = arith.constant dense<0xFF800000> : vector<256xf32>
    %104 = vector.multi_reduction <maximumf>, %103, %cst_24 [0] : vector<16x256xf32> to vector<256xf32>
    %105 = vector.shape_cast %104 : vector<256xf32> to vector<1x256xf32>
    %106 = vector.broadcast %105 : vector<1x256xf32> to vector<16x256xf32>
    %107 = arith.cmpf oeq, %103, %106 : vector<16x256xf32>
    %c16_i32_25 = arith.constant 16 : i32
    %108 = vector.broadcast %c16_i32_25 : i32 to vector<16x256xi32>
    %109 = arith.select %107, %38, %108 : vector<16x256xi1>, vector<16x256xi32>
    %cst_26 = arith.constant dense<2147483647> : vector<256xi32>
    %110 = vector.multi_reduction <minsi>, %109, %cst_26 [0] : vector<16x256xi32> to vector<256xi32>
    %111 = vector.shape_cast %110 : vector<256xi32> to vector<1x256xi32>
    %112 = vector.broadcast %111 : vector<1x256xi32> to vector<16x256xi32>
    %113 = arith.cmpi eq, %38, %112 : vector<16x256xi32>
    %114 = arith.extui %113 : vector<16x256xi1> to vector<16x256xi32>
    %115 = arith.sitofp %114 : vector<16x256xi32> to vector<16x256xf32>
    %cst_27 = arith.constant dense<0.000000e+00> : vector<16xf32>
    %116 = vector.multi_reduction <add>, %115, %cst_27 [1] : vector<16x256xf32> to vector<16xf32>
    %117 = vector.shape_cast %116 : vector<16xf32> to vector<16x1xf32>
    %118 = vector.extract_strided_slice %0 {offsets = [48, 0], sizes = [16, 128], strides = [1, 1]} : vector<64x128xf32> to vector<16x128xf32>
    %119 = vector.broadcast %117 : vector<16x1xf32> to vector<16x128xf32>
    %120 = arith.mulf %119, %118 : vector<16x128xf32>
    %cst_28 = arith.constant dense<0.000000e+00> : vector<128xf32>
    %121 = vector.multi_reduction <add>, %120, %cst_28 [0] : vector<16x128xf32> to vector<128xf32>
    %122 = vector.shape_cast %121 : vector<128xf32> to vector<1x128xf32>
    %123 = arith.addf %102, %122 : vector<1x128xf32>
    %124 = vector.shape_cast %123 : vector<1x128xf32> to vector<1x128xf32>
    %125 = vector.broadcast %124 : vector<1x128xf32> to vector<8x128xf32>
    %c0_29 = arith.constant 0 : index
    %c0_30 = arith.constant 0 : index
    %c0_31 = arith.constant 0 : index
    %126 = vector.load %arg3[%c0_29, %c0_30, %c0_31] : memref<1x8x128xf32, #tpu.memory_space<vmem>>, vector<1x8x128xf32>
    %127 = vector.shape_cast %126 : vector<1x8x128xf32> to vector<8x128xf32>
    %128 = vector.shape_cast %125 : vector<8x128xf32> to vector<1x8x128xf32>
    tpu.vector_store %arg3[%c0_29, %c0_30, %c0_31], %128 {strides = array<i32>} : memref<1x8x128xf32, #tpu.memory_space<vmem>>, vector<1x8x128xf32>,
    return
  }
  func.func @transform_0(%arg0: i32) -> (i32, i32, i32) {
    %c0_i32 = arith.constant 0 : i32
    %c0_i32_0 = arith.constant 0 : i32
    %c0_i32_1 = arith.constant 0 : i32
    return %arg0, %c0_i32, %c0_i32_0 : i32, i32, i32
  }
  func.func @transform_1(%arg0: i32) -> (i32, i32) {
    %c0_i32 = arith.constant 0 : i32
    %c0_i32_0 = arith.constant 0 : i32
    %c0_i32_1 = arith.constant 0 : i32
    return %c0_i32, %c0_i32_0 : i32, i32
  }
  func.func @transform_2(%arg0: i32) -> (i32, i32, i32) {
    %c0_i32 = arith.constant 0 : i32
    %c0_i32_0 = arith.constant 0 : i32
    %c0_i32_1 = arith.constant 0 : i32
    return %arg0, %c0_i32, %c0_i32_0 : i32, i32, i32
  }
}

</mosaic_0001>

<llo_original>
// kernel: backbone_eval_forward.1
$region0: #{backbone_eval_forward.1}
  #allocation0 [shape = 'u32[]', space=smem, size = 0x4, offset = 0x4, fixed_abs, tag = 'smem constant byte address 0x4 - core index']
  #allocation1 [shape = 'u32[72,128]{1,0:T(1,128)}', space=vmem, size = 0x9000, scoped, tag = 'internal scratch']
  %s0 = inlined_call_operand.vmem [shape: f32[2,4,256], index: 0, kind: input, shape index: {}]
  %s1 = inlined_call_operand.vmem [shape: f32[64,166], index: 1, kind: input, shape index: {}]
  %s2 = inlined_call_operand.vmem [shape: f32[2,8,128], index: 2, kind: output, shape index: {}]
  %s3 = sld [smem:[#allocation0]]
  $region41: #{backbone_eval_forward.1} parent=0
    _
  %s5 = ssub.s32 1, %s3
  %s6 = scalar_select 0, %s5, %s3
  loop: start=0, step=1, limit=4
  $region2: #{backbone_eval_forward.1} parent=0 // loop_pre_header
    _
  $region3: #{backbone_eval_forward.1} parent=0 // loop_header
    %s8 = sphi 0, %s12
    %p9 = scmp.ge.s32.totalorder %s8, 4
    %s18 = sphi 0, %s20
    %s21 = sphi 0, %s18
    %s22 = sphi 0, %s21
    %s38 = sphi 0, %s22
    %s42 = sphi 0, %s42
    %s44 = sphi 0, %s42
    %s45 = sphi 0, %s44
    %s59 = sphi 0, %s45
    %s65 = sphi 0, %s67
    %s68 = sphi 0, %s65
    %s69 = sphi 0, %s68
    %s85 = sphi 0, %s69
  $region4: #{backbone_eval_forward.1} parent=0 // loop_header_branch
    %11 = sbr.rel (%p9) target = $region8
  $region5: #{backbone_eval_forward.1} parent=0 // loop_body
    %s13 = ssub.s32 %s8, 1
    %s14 = ssub.s32 %s8, 2
    %s15 = sadd.s32 %s8, 1
    %s16 = ssub.s32 %s8, %s15
    %p17 = scmp.eq.s32.totalorder %s16, 0
    %s19 = sadd.s32 %s18, 1
    %s20 = scalar_select %p17, %s18, %s19
    %p23 = pneg %p17
    %p24 = scmp.eq.s32.totalorder %s8, 1
    %p25 = por %p23, %p24
    %p26 = scmp.ne.s32.totalorder %s18, %s21
    %p27 = scmp.eq.s32.totalorder %s8, 0
    %p28 = por %p26, %p27
    %p29 = scmp.ne.s32.totalorder %s18, %s21
    %p30 = scmp.eq.s32.totalorder %s13, 1
    %p31 = por %p29, %p30
    %p32 = scmp.ne.s32.totalorder %s21, %s22
    %p33 = scmp.eq.s32.totalorder %s13, 0
    %p34 = por %p32, %p33
    %p35 = scmp.ne.s32.totalorder %s21, %s22
    %p36 = scmp.eq.s32.totalorder %s14, 1
    %p37 = por %p35, %p36
    %p39 = scmp.ne.s32.totalorder %s22, %s38
    %p40 = scmp.eq.s32.totalorder %s14, 0
    %p41 = por %p39, %p40
    %s43 = sadd.s32 %s42, 1
    %p46 = scmp.eq.s32.totalorder %s8, 1
    %p47 = scmp.ne.s32.totalorder %s42, %s44
    %p48 = scmp.eq.s32.totalorder %s8, 0
    %p49 = por %p47, %p48
    %p50 = scmp.ne.s32.totalorder %s42, %s44
    %p51 = scmp.eq.s32.totalorder %s13, 1
    %p52 = por %p50, %p51
    %p53 = scmp.ne.s32.totalorder %s44, %s45
    %p54 = scmp.eq.s32.totalorder %s13, 0
    %p55 = por %p53, %p54
    %p56 = scmp.ne.s32.totalorder %s44, %s45
    %p57 = scmp.eq.s32.totalorder %s14, 1
    %p58 = por %p56, %p57
    %p60 = scmp.ne.s32.totalorder %s45, %s59
    %p61 = scmp.eq.s32.totalorder %s14, 0
    %p62 = por %p60, %p61
    %s63 = ssub.s32 %s8, %s15
    %p64 = scmp.eq.s32.totalorder %s63, 0
    %s66 = sadd.s32 %s65, 1
    %s67 = scalar_select %p64, %s65, %s66
    %p70 = pneg %p64
    %p71 = scmp.eq.s32.totalorder %s8, 1
    %p72 = por %p70, %p71
    %p73 = scmp.ne.s32.totalorder %s65, %s68
    %p74 = scmp.eq.s32.totalorder %s8, 0
    %p75 = por %p73, %p74
    %p76 = scmp.ne.s32.totalorder %s65, %s68
    %p77 = scmp.eq.s32.totalorder %s13, 1
    %p78 = por %p76, %p77
    %p79 = scmp.ne.s32.totalorder %s68, %s69
    %p80 = scmp.eq.s32.totalorder %s13, 0
    %p81 = por %p79, %p80
    %p82 = scmp.ne.s32.totalorder %s68, %s69
    %p83 = scmp.eq.s32.totalorder %s14, 1
    %p84 = por %p82, %p83
    %p86 = scmp.ne.s32.totalorder %s69, %s85
    %p87 = scmp.eq.s32.totalorder %s14, 0
    %p88 = por %p86, %p87
    %p89 = scmp.le.s32.totalorder 1, %s8
    %p90 = scmp.lt.s32.totalorder %s8, 3
    %p91 = pnand %p89, %p90
    %p92 = pneg %p91
    // Predicated region
    $region9: #{backbone_eval_forward.1} parent=5 // pred_check
      _
    $region10: #{backbone_eval_forward.1} parent=5 // pred_check_branch
      %94 = sbr.rel (%p91) target = $region12
    $region11: #{backbone_eval_forward.1} parent=5 // pred_region
      %s95 = ssub.s32 %s8, 1
      // Predicated region
      $region13: #{backbone_eval_forward.1} parent=11 // pred_check
        %p96 = pneg %p55
      $region14: #{backbone_eval_forward.1} parent=11 // pred_check_branch
        %98 = sbr.rel (%p96) target = $region16
      $region15: #{backbone_eval_forward.1} parent=11 // pred_region
        _
      $region16: #{backbone_eval_forward.1} parent=11 // pred_fallthru
        _
    $region12: #{backbone_eval_forward.1} parent=5 // pred_fallthru
      _
    %p99 = scmp.lt.s32.totalorder %s8, 2
    // Predicated region
    $region17: #{backbone_eval_forward.1} parent=5 // pred_check
      %p100 = pneg %p99
    $region18: #{backbone_eval_forward.1} parent=5 // pred_check_branch
      %102 = sbr.rel (%p100) target = $region20
    $region19: #{backbone_eval_forward.1} parent=5 // pred_region
      // Predicated region
      $region21: #{backbone_eval_forward.1} parent=19 // pred_check
        %p103 = pneg %p28
      $region22: #{backbone_eval_forward.1} parent=19 // pred_check_branch
        %105 = sbr.rel (%p103) target = $region24
      $region23: #{backbone_eval_forward.1} parent=19 // pred_region
        %p106 = scmp.lt.s32.totalorder %s8, 1
        %s107 = scalar_select %p106, %s8, 1
        %s108 = smul.addr %s107, 2
        %s109 = smul.addr %s108, 4
        %s110 = scalar_lea.vmem %s0, %s109
      $region24: #{backbone_eval_forward.1} parent=19 // pred_fallthru
        _
    $region20: #{backbone_eval_forward.1} parent=5 // pred_fallthru
      _
    %p111 = scmp.le.s32.totalorder 1, %s8
    %p112 = scmp.lt.s32.totalorder %s8, 3
    %p113 = pnand %p111, %p112
    %p114 = pneg %p113
    // Predicated region
    $region25: #{backbone_eval_forward.1} parent=5 // pred_check
      _
    $region26: #{backbone_eval_forward.1} parent=5 // pred_check_branch
      %116 = sbr.rel (%p113) target = $region28
    $region27: #{backbone_eval_forward.1} parent=5 // pred_region
      %s117 = ssub.s32 %s8, 1
      %p118 = scmp.lt.s32.totalorder %s13, 1
      %s119 = scalar_select %p118, %s13, 1
      %s120 = smul.addr %s119, 2
      %s121 = smul.addr %s120, 4
      %s122 = scalar_lea.vmem %s0, %s121
      %p123 = pneg %p34
      %p124 = pneg %p31
      %p125 = pneg %p55
      %p126 = pneg %p52
      %p127 = pneg %p81
      %p128 = pneg %p78
      %p129 = scmp.lt.s32.totalorder %s13, 1
      %s130 = scalar_select %p129, %s13, 1
      %s131 = smul.addr %s130, 8
      %s132 = scalar_lea.vmem %s2, %s131
      %p133 = scmp.lt.s32.totalorder %s13, 1
      %s134 = scalar_select %p133, %s13, 1
      %s135 = smul.addr %s134, 2
      %s136 = smul.addr %s135, 4
      %s137 = scalar_lea.vmem %s0, %s136
      %p138 = scmp.lt.s32.totalorder %s13, 1
      %s139 = scalar_select %p138, %s13, 1
      %s140 = smul.addr %s139, 8
      %s141 = scalar_lea.vmem %s2, %s140
      %v142 = vld [vmem:[%s1] sm:$0xff]
      %v143 = vld [vmem:[%s1 + $0x10] sm:$0xff]
      %v144 = vld [vmem:[%s1 + $0x20] sm:$0xff]
      %v145 = vld [vmem:[%s1 + $0x30] sm:$0xff]
      %v146 = vld [vmem:[%s1 + $0x40] sm:$0xff]
      %v147 = vld [vmem:[%s1 + $0x50] sm:$0xff]
      %v148 = vld [vmem:[%s1 + $0x60] sm:$0xff]
      %v149 = vld [vmem:[%s1 + $0x70] sm:$0xff]
      %v150 = vld [vmem:[%s1 + $0x8] sm:$0xff]
      %v151 = vld [vmem:[%s1 + $0x18] sm:$0xff]
      %v152 = vld [vmem:[%s1 + $0x28] sm:$0xff]
      %v153 = vld [vmem:[%s1 + $0x38] sm:$0xff]
      %v154 = vld [vmem:[%s1 + $0x48] sm:$0xff]
      %v155 = vld [vmem:[%s1 + $0x58] sm:$0xff]
      %v156 = vld [vmem:[%s1 + $0x68] sm:$0xff]
      %v157 = vld [vmem:[%s1 + $0x78] sm:$0xff]
      %v158 = vld [vmem:[%s137] sm:$0xff]
      %160 = vset.pattern.permute.xlu0 36
      %161 = vperm.xlu0 %160, %v150
      %v162 = vpop.permute.xlu0 %161
      %165 = vset.pattern.permute.xlu0 36
      %166 = vperm.xlu0 %165, %v151
      %v167 = vpop.permute.xlu0 %166
      %170 = vset.pattern.permute.xlu0 36
      %171 = vperm.xlu0 %170, %v152
      %v172 = vpop.permute.xlu0 %171
      %175 = vset.pattern.permute.xlu0 36
      %176 = vperm.xlu0 %175, %v153
      %v177 = vpop.permute.xlu0 %176
      %179 = vset.pattern.permute.xlu0 32
      %180 = vperm.xlu0 %179, %v150
      %v181 = vpop.permute.xlu0 %180
      %183 = vset.pattern.permute.xlu0 32
      %184 = vperm.xlu0 %183, %v151
      %v185 = vpop.permute.xlu0 %184
      %187 = vset.pattern.permute.xlu0 32
      %188 = vperm.xlu0 %187, %v152
      %v189 = vpop.permute.xlu0 %188
      %191 = vset.pattern.permute.xlu0 32
      %192 = vperm.xlu0 %191, %v153
      %v193 = vpop.permute.xlu0 %192
      %v196 = vperm.slane %v158, 0
      %v197 = vperm.slane %v158, 4
      %v200 = vperm.slane %v196, 0
      %v201 = vperm.slane %v197, 0
      %v202 = vmul.f32 %v181, %v200
      %v203 = vmul.f32 %v181, %v201
      %v204 = vmul.f32 %v185, %v200
      %v205 = vmul.f32 %v185, %v201
      %v206 = vmul.f32 %v189, %v200
      %v207 = vmul.f32 %v189, %v201
      %v208 = vmul.f32 %v193, %v200
      %v209 = vmul.f32 %v193, %v201
      %v210 = vadd.f32 %v162, %v202
      %v211 = vadd.f32 %v162, %v203
      %v212 = vadd.f32 %v167, %v204
      %v213 = vadd.f32 %v167, %v205
      %v214 = vadd.f32 %v172, %v206
      %v215 = vadd.f32 %v172, %v207
      %v216 = vadd.f32 %v177, %v208
      %v217 = vadd.f32 %v177, %v209
      %218 = vset.pattern.permute.xlu0 33
      %219 = vperm.xlu0 %218, %v150
      %v220 = vpop.permute.xlu0 %219
      %222 = vset.pattern.permute.xlu0 33
      %223 = vperm.xlu0 %222, %v151
      %v224 = vpop.permute.xlu0 %223
      %226 = vset.pattern.permute.xlu0 33
      %227 = vperm.xlu0 %226, %v152
      %v228 = vpop.permute.xlu0 %227
      %230 = vset.pattern.permute.xlu0 33
      %231 = vperm.xlu0 %230, %v153
      %v232 = vpop.permute.xlu0 %231
      %v234 = vperm.slane %v158, 1
      %v235 = vperm.slane %v158, 5
      %v238 = vperm.slane %v234, 1
      %v239 = vperm.slane %v235, 1
      %v240 = vmul.f32 %v220, %v238
      %v241 = vmul.f32 %v220, %v239
      %v242 = vmul.f32 %v224, %v238
      %v243 = vmul.f32 %v224, %v239
      %v244 = vmul.f32 %v228, %v238
      %v245 = vmul.f32 %v228, %v239
      %v246 = vmul.f32 %v232, %v238
      %v247 = vmul.f32 %v232, %v239
      %v248 = vadd.f32 %v210, %v240
      %v249 = vadd.f32 %v211, %v241
      %v250 = vadd.f32 %v212, %v242
      %v251 = vadd.f32 %v213, %v243
      %v252 = vadd.f32 %v214, %v244
      %v253 = vadd.f32 %v215, %v245
      %v254 = vadd.f32 %v216, %v246
      %v255 = vadd.f32 %v217, %v247
      %256 = vset.pattern.permute.xlu0 34
      %257 = vperm.xlu0 %256, %v150
      %v258 = vpop.permute.xlu0 %257
      %260 = vset.pattern.permute.xlu0 34
      %261 = vperm.xlu0 %260, %v151
      %v262 = vpop.permute.xlu0 %261
      %264 = vset.pattern.permute.xlu0 34
      %265 = vperm.xlu0 %264, %v152
      %v266 = vpop.permute.xlu0 %265
      %268 = vset.pattern.permute.xlu0 34
      %269 = vperm.xlu0 %268, %v153
      %v270 = vpop.permute.xlu0 %269
      %v272 = vperm.slane %v158, 2
      %v273 = vperm.slane %v158, 6
      %v276 = vperm.slane %v272, 2
      %v277 = vperm.slane %v273, 2
      %v278 = vmul.f32 %v258, %v276
      %v279 = vmul.f32 %v258, %v277
      %v280 = vmul.f32 %v262, %v276
      %v281 = vmul.f32 %v262, %v277
      %v282 = vmul.f32 %v266, %v276
      %v283 = vmul.f32 %v266, %v277
      %v284 = vmul.f32 %v270, %v276
      %v285 = vmul.f32 %v270, %v277
      %v286 = vadd.f32 %v248, %v278
      %v287 = vadd.f32 %v249, %v279
      %v288 = vadd.f32 %v250, %v280
      %v289 = vadd.f32 %v251, %v281
      %v290 = vadd.f32 %v252, %v282
      %v291 = vadd.f32 %v253, %v283
      %v292 = vadd.f32 %v254, %v284
      %v293 = vadd.f32 %v255, %v285
      %294 = vset.pattern.permute.xlu0 35
      %295 = vperm.xlu0 %294, %v150
      %v296 = vpop.permute.xlu0 %295
      %298 = vset.pattern.permute.xlu0 35
      %299 = vperm.xlu0 %298, %v151
      %v300 = vpop.permute.xlu0 %299
      %302 = vset.pattern.permute.xlu0 35
      %303 = vperm.xlu0 %302, %v152
      %v304 = vpop.permute.xlu0 %303
      %306 = vset.pattern.permute.xlu0 35
      %307 = vperm.xlu0 %306, %v153
      %v308 = vpop.permute.xlu0 %307
      %v310 = vperm.slane %v158, 3
      %v311 = vperm.slane %v158, 7
      %v314 = vperm.slane %v310, 3
      %v315 = vperm.slane %v311, 3
      %v316 = vmul.f32 %v296, %v314
      %v317 = vmul.f32 %v296, %v315
      %v318 = vmul.f32 %v300, %v314
      %v319 = vmul.f32 %v300, %v315
      %v320 = vmul.f32 %v304, %v314
      %v321 = vmul.f32 %v304, %v315
      %v322 = vmul.f32 %v308, %v314
      %v323 = vmul.f32 %v308, %v315
      %v324 = vadd.f32 %v286, %v316
      %v325 = vadd.f32 %v287, %v317
      %v326 = vadd.f32 %v288, %v318
      %v327 = vadd.f32 %v289, %v319
      %v328 = vadd.f32 %v290, %v320
      %v329 = vadd.f32 %v291, %v321
      %v330 = vadd.f32 %v292, %v322
      %v331 = vadd.f32 %v293, %v323
      %v332 = vmax.f32 %v324, 0.0
      %v333 = vmax.f32 %v325, 0.0
      %v334 = vmax.f32 %v326, 0.0
      %v335 = vmax.f32 %v327, 0.0
      %v336 = vmax.f32 %v328, 0.0
      %v337 = vmax.f32 %v329, 0.0
      %v338 = vmax.f32 %v330, 0.0
      %v339 = vmax.f32 %v331, 0.0
      %340 = vset.pattern.permute.xlu0 37
      %341 = vperm.xlu0 %340, %v150
      %v342 = vpop.permute.xlu0 %341
      %344 = vset.pattern.permute.xlu0 37
      %345 = vperm.xlu0 %344, %v151
      %v346 = vpop.permute.xlu0 %345
      %348 = vset.pattern.permute.xlu0 37
      %349 = vperm.xlu0 %348, %v152
      %v350 = vpop.permute.xlu0 %349
      %352 = vset.pattern.permute.xlu0 37
      %353 = vperm.xlu0 %352, %v153
      %v354 = vpop.permute.xlu0 %353
      %357 = vset.pattern.permute.xlu0 37
      %358 = vperm.xlu0 %357, %v154
      %v359 = vpop.permute.xlu0 %358
      %362 = vset.pattern.permute.xlu0 37
      %363 = vperm.xlu0 %362, %v155
      %v364 = vpop.permute.xlu0 %363
      %367 = vset.pattern.permute.xlu0 37
      %368 = vperm.xlu0 %367, %v156
      %v369 = vpop.permute.xlu0 %368
      %372 = vset.pattern.permute.xlu0 37
      %373 = vperm.xlu0 %372, %v157
      %v374 = vpop.permute.xlu0 %373
      %vm376 = vcmask 261120
      %v377 = vsel %vm376, %v150, 0
      %v379 = vsel %vm376, %v151, 0
      %v381 = vsel %vm376, %v152, 0
      %v383 = vsel %vm376, %v153, 0
      %v385 = vsel %vm376, %v154, 0
      %v387 = vsel %vm376, %v155, 0
      %v389 = vsel %vm376, %v156, 0
      %v391 = vsel %vm376, %v157, 0
      %393 = vmatpush.msra.mxu0 0.0
      %394 = vmatpush.msra.mxu0 0.0
      %395 = vmatpush.msra.mxu0 0.0
      %396 = vmatpush.msra.mxu0 0.0
      %397 = vmatpush.msra.mxu0 0.0
      %398 = vmatpush.msra.mxu0 0.0
      %399 = vmatpush.msra.mxu0 0.0
      %400 = vmatpush.msra.mxu0 0.0
      %401 = vmatpush.msra.mxu0 0.0
      %402 = vmatpush.msra.mxu0 0.0
      %403 = vmatpush.msra.mxu0 0.0
      %404 = vmatpush.msra.mxu0 0.0
      %405 = vmatpush.msra.mxu0 %v338
      %406 = vmatpush.msra.mxu0 %v336
      %407 = vmatpush.msra.mxu0 %v334
      %408 = vmatpush.msra.mxu0 %v332
      %409 = vmatmul.f32.gmra.mxu0 %v377
      %v410 = vpop.f32.mrf.mxu0
      %v411 = vadd.f32 %v342, %v410
      %412 = vmatmul.f32.gmra.mxu0 %v379
      %v413 = vpop.f32.mrf.mxu0
      %v414 = vadd.f32 %v346, %v413
      %415 = vmatmul.f32.gmra.mxu0 %v381
      %v416 = vpop.f32.mrf.mxu0
      %v417 = vadd.f32 %v350, %v416
      %418 = vmatmul.f32.gmra.mxu0 %v383
      %v419 = vpop.f32.mrf.mxu0
      %v420 = vadd.f32 %v354, %v419
      %421 = vmatmul.f32.gmra.mxu0 %v385
      %v422 = vpop.f32.mrf.mxu0
      %v423 = vadd.f32 %v359, %v422
      %424 = vmatmul.f32.gmra.mxu0 %v387
      %v425 = vpop.f32.mrf.mxu0
      %v426 = vadd.f32 %v364, %v425
      %427 = vmatmul.f32.gmra.mxu0 %v389
      %v428 = vpop.f32.mrf.mxu0
      %v429 = vadd.f32 %v369, %v428
      %430 = vmatmul.f32.gmra.mxu0 %v391
      %v431 = vpop.f32.mrf.mxu0
      %v432 = vadd.f32 %v374, %v431
      %433 = vdwg.mxu0
      %434 = vmatpush.msra.mxu0 0.0
      %435 = vmatpush.msra.mxu0 0.0
      %436 = vmatpush.msra.mxu0 0.0
      %437 = vmatpush.msra.mxu0 0.0
      %438 = vmatpush.msra.mxu0 0.0
      %439 = vmatpush.msra.mxu0 0.0
      %440 = vmatpush.msra.mxu0 0.0
      %441 = vmatpush.msra.mxu0 0.0
      %442 = vmatpush.msra.mxu0 0.0
      %443 = vmatpush.msra.mxu0 0.0
      %444 = vmatpush.msra.mxu0 0.0
      %445 = vmatpush.msra.mxu0 0.0
      %446 = vmatpush.msra.mxu0 %v339
      %447 = vmatpush.msra.mxu0 %v337
      %448 = vmatpush.msra.mxu0 %v335
      %449 = vmatpush.msra.mxu0 %v333
      %450 = vmatmul.f32.gmra.mxu0 %v377
      %v451 = vpop.f32.mrf.mxu0
      %v452 = vadd.f32 %v342, %v451
      %453 = vmatmul.f32.gmra.mxu0 %v379
      %v454 = vpop.f32.mrf.mxu0
      %v455 = vadd.f32 %v346, %v454
      %456 = vmatmul.f32.gmra.mxu0 %v381
      %v457 = vpop.f32.mrf.mxu0
      %v458 = vadd.f32 %v350, %v457
      %459 = vmatmul.f32.gmra.mxu0 %v383
      %v460 = vpop.f32.mrf.mxu0
      %v461 = vadd.f32 %v354, %v460
      %462 = vmatmul.f32.gmra.mxu0 %v385
      %v463 = vpop.f32.mrf.mxu0
      %v464 = vadd.f32 %v359, %v463
      %465 = vmatmul.f32.gmra.mxu0 %v387
      %v466 = vpop.f32.mrf.mxu0
      %v467 = vadd.f32 %v364, %v466
      %468 = vmatmul.f32.gmra.mxu0 %v389
      %v469 = vpop.f32.mrf.mxu0
      %v470 = vadd.f32 %v369, %v469
      %471 = vmatmul.f32.gmra.mxu0 %v391
      %v472 = vpop.f32.mrf.mxu0
      %v473 = vadd.f32 %v374, %v472
      %474 = vdwg.mxu0
      %v475 = vlaneseq
      %v476 = vshrl.u32 %v475, 7
      %v477 = vadd.s32 %v476, 8
      %v478 = vmax.f32 %v411, %v414
      %v479 = vrot.slane %v478, 4
      %v480 = vmax.f32 %v478, %v479
      %v481 = vrot.slane %v480, 2
      %v482 = vmax.f32 %v480, %v481
      %v483 = vrot.slane %v482, 1
      %v484 = vmax.f32 %v482, %v483
      %v485 = vmax.f32 %v452, %v455
      %v486 = vrot.slane %v485, 4
      %v487 = vmax.f32 %v485, %v486
      %v488 = vrot.slane %v487, 2
      %v489 = vmax.f32 %v487, %v488
      %v490 = vrot.slane %v489, 1
      %v491 = vmax.f32 %v489, %v490
      %vm492 = vcmp.eq.f32.partialorder %v411, %v484
      %vm493 = vcmp.eq.f32.partialorder %v452, %v491
      %vm494 = vcmp.eq.f32.partialorder %v414, %v484
      %vm495 = vcmp.eq.f32.partialorder %v455, %v491
      %v496 = vsel %vm492, %v476, 16
      %v497 = vsel %vm493, %v476, 16
      %v498 = vsel %vm494, %v477, 16
      %v499 = vsel %vm495, %v477, 16
      %vm500 = vcmp.lt.s32.totalorder %v496, %v498
      %v501 = vsel %vm500, %v496, %v498
      %v502 = vrot.slane %v501, 4
      %vm503 = vcmp.lt.s32.totalorder %v501, %v502
      %v504 = vsel %vm503, %v501, %v502
      %v505 = vrot.slane %v504, 2
      %vm506 = vcmp.lt.s32.totalorder %v504, %v505
      %v507 = vsel %vm506, %v504, %v505
      %v508 = vrot.slane %v507, 1
      %vm509 = vcmp.lt.s32.totalorder %v507, %v508
      %v510 = vsel %vm509, %v507, %v508
      %vm511 = vcmp.lt.s32.totalorder %v497, %v499
      %v512 = vsel %vm511, %v497, %v499
      %v513 = vrot.slane %v512, 4
      %vm514 = vcmp.lt.s32.totalorder %v512, %v513
      %v515 = vsel %vm514, %v512, %v513
      %v516 = vrot.slane %v515, 2
      %vm517 = vcmp.lt.s32.totalorder %v515, %v516
      %v518 = vsel %vm517, %v515, %v516
      %v519 = vrot.slane %v518, 1
      %vm520 = vcmp.lt.s32.totalorder %v518, %v519
      %v521 = vsel %vm520, %v518, %v519
      %vm522 = vcmp.eq.s32.totalorder %v476, %v510
      %vm523 = vcmp.eq.s32.totalorder %v476, %v521
      %vm524 = vcmp.eq.s32.totalorder %v477, %v510
      %vm525 = vcmp.eq.s32.totalorder %v477, %v521
      %v526 = vsel %vm522, 1, 0
      %v527 = vsel %vm523, 1, 0
      %v528 = vsel %vm524, 1, 0
      %v529 = vsel %vm525, 1, 0
      %v530 = vcvt.s32.f32 %v526
      %v531 = vcvt.s32.f32 %v527
      %v532 = vcvt.s32.f32 %v528
      %v533 = vcvt.s32.f32 %v529
      %v534 = vadd.f32 %v530, %v531
      %535 = vadd.xlane.f32.xlu0 %v534
      %v536 = vpop.xlane.xlu0 %535
      %v537 = vadd.f32 %v532, %v533
      %538 = vadd.xlane.f32.xlu0 %v537
      %v539 = vpop.xlane.xlu0 %538
      %v540 = vmul.f32 %v536, %v142
      %v541 = vmul.f32 %v539, %v143
      %v542 = vadd.f32 %v540, %v541
      %v543 = vrot.slane %v542, 4
      %v544 = vadd.f32 %v542, %v543
      %v545 = vrot.slane %v544, 2
      %v546 = vadd.f32 %v544, %v545
      %v547 = vrot.slane %v546, 1
      %v548 = vadd.f32 %v546, %v547
      %v549 = vadd.f32 %v548, 0.0
      %v550 = vmax.f32 %v417, %v420
      %v551 = vrot.slane %v550, 4
      %v552 = vmax.f32 %v550, %v551
      %v553 = vrot.slane %v552, 2
      %v554 = vmax.f32 %v552, %v553
      %v555 = vrot.slane %v554, 1
      %v556 = vmax.f32 %v554, %v555
      %v557 = vmax.f32 %v458, %v461
      %v558 = vrot.slane %v557, 4
      %v559 = vmax.f32 %v557, %v558
      %v560 = vrot.slane %v559, 2
      %v561 = vmax.f32 %v559, %v560
      %v562 = vrot.slane %v561, 1
      %v563 = vmax.f32 %v561, %v562
      %vm564 = vcmp.eq.f32.partialorder %v417, %v556
      %vm565 = vcmp.eq.f32.partialorder %v458, %v563
      %vm566 = vcmp.eq.f32.partialorder %v420, %v556
      %vm567 = vcmp.eq.f32.partialorder %v461, %v563
      %v568 = vsel %vm564, %v476, 16
      %v569 = vsel %vm565, %v476, 16
      %v570 = vsel %vm566, %v477, 16
      %v571 = vsel %vm567, %v477, 16
      %vm572 = vcmp.lt.s32.totalorder %v568, %v570
      %v573 = vsel %vm572, %v568, %v570
      %v574 = vrot.slane %v573, 4
      %vm575 = vcmp.lt.s32.totalorder %v573, %v574
      %v576 = vsel %vm575, %v573, %v574
      %v577 = vrot.slane %v576, 2
      %vm578 = vcmp.lt.s32.totalorder %v576, %v577
      %v579 = vsel %vm578, %v576, %v577
      %v580 = vrot.slane %v579, 1
      %vm581 = vcmp.lt.s32.totalorder %v579, %v580
      %v582 = vsel %vm581, %v579, %v580
      %vm583 = vcmp.lt.s32.totalorder %v569, %v571
      %v584 = vsel %vm583, %v569, %v571
      %v585 = vrot.slane %v584, 4
      %vm586 = vcmp.lt.s32.totalorder %v584, %v585
      %v587 = vsel %vm586, %v584, %v585
      %v588 = vrot.slane %v587, 2
      %vm589 = vcmp.lt.s32.totalorder %v587, %v588
      %v590 = vsel %vm589, %v587, %v588
      %v591 = vrot.slane %v590, 1
      %vm592 = vcmp.lt.s32.totalorder %v590, %v591
      %v593 = vsel %vm592, %v590, %v591
      %vm594 = vcmp.eq.s32.totalorder %v476, %v582
      %vm595 = vcmp.eq.s32.totalorder %v476, %v593
      %vm596 = vcmp.eq.s32.totalorder %v477, %v582
      %vm597 = vcmp.eq.s32.totalorder %v477, %v593
      %v598 = vsel %vm594, 1, 0
      %v599 = vsel %vm595, 1, 0
      %v600 = vsel %vm596, 1, 0
      %v601 = vsel %vm597, 1, 0
      %v602 = vcvt.s32.f32 %v598
      %v603 = vcvt.s32.f32 %v599
      %v604 = vcvt.s32.f32 %v600
      %v605 = vcvt.s32.f32 %v601
      %v606 = vadd.f32 %v602, %v603
      %607 = vadd.xlane.f32.xlu0 %v606
      %v608 = vpop.xlane.xlu0 %607
      %v609 = vadd.f32 %v604, %v605
      %610 = vadd.xlane.f32.xlu0 %v609
      %v611 = vpop.xlane.xlu0 %610
      %v612 = vmul.f32 %v608, %v144
      %v613 = vmul.f32 %v611, %v145
      %v614 = vadd.f32 %v612, %v613
      %v615 = vrot.slane %v614, 4
      %v616 = vadd.f32 %v614, %v615
      %v617 = vrot.slane %v616, 2
      %v618 = vadd.f32 %v616, %v617
      %v619 = vrot.slane %v618, 1
      %v620 = vadd.f32 %v618, %v619
      %v621 = vadd.f32 %v549, %v620
      %v622 = vmax.f32 %v423, %v426
      %v623 = vrot.slane %v622, 4
      %v624 = vmax.f32 %v622, %v623
      %v625 = vrot.slane %v624, 2
      %v626 = vmax.f32 %v624, %v625
      %v627 = vrot.slane %v626, 1
      %v628 = vmax.f32 %v626, %v627
      %v629 = vmax.f32 %v464, %v467
      %v630 = vrot.slane %v629, 4
      %v631 = vmax.f32 %v629, %v630
      %v632 = vrot.slane %v631, 2
      %v633 = vmax.f32 %v631, %v632
      %v634 = vrot.slane %v633, 1
      %v635 = vmax.f32 %v633, %v634
      %vm636 = vcmp.eq.f32.partialorder %v423, %v628
      %vm637 = vcmp.eq.f32.partialorder %v464, %v635
      %vm638 = vcmp.eq.f32.partialorder %v426, %v628
      %vm639 = vcmp.eq.f32.partialorder %v467, %v635
      %v640 = vsel %vm636, %v476, 16
      %v641 = vsel %vm637, %v476, 16
      %v642 = vsel %vm638, %v477, 16
      %v643 = vsel %vm639, %v477, 16
      %vm644 = vcmp.lt.s32.totalorder %v640, %v642
      %v645 = vsel %vm644, %v640, %v642
      %v646 = vrot.slane %v645, 4
      %vm647 = vcmp.lt.s32.totalorder %v645, %v646
      %v648 = vsel %vm647, %v645, %v646
      %v649 = vrot.slane %v648, 2
      %vm650 = vcmp.lt.s32.totalorder %v648, %v649
      %v651 = vsel %vm650, %v648, %v649
      %v652 = vrot.slane %v651, 1
      %vm653 = vcmp.lt.s32.totalorder %v651, %v652
      %v654 = vsel %vm653, %v651, %v652
      %vm655 = vcmp.lt.s32.totalorder %v641, %v643
      %v656 = vsel %vm655, %v641, %v643
      %v657 = vrot.slane %v656, 4
      %vm658 = vcmp.lt.s32.totalorder %v656, %v657
      %v659 = vsel %vm658, %v656, %v657
      %v660 = vrot.slane %v659, 2
      %vm661 = vcmp.lt.s32.totalorder %v659, %v660
      %v662 = vsel %vm661, %v659, %v660
      %v663 = vrot.slane %v662, 1
      %vm664 = vcmp.lt.s32.totalorder %v662, %v663
      %v665 = vsel %vm664, %v662, %v663
      %vm666 = vcmp.eq.s32.totalorder %v476, %v654
      %vm667 = vcmp.eq.s32.totalorder %v476, %v665
      %vm668 = vcmp.eq.s32.totalorder %v477, %v654
      %vm669 = vcmp.eq.s32.totalorder %v477, %v665
      %v670 = vsel %vm666, 1, 0
      %v671 = vsel %vm667, 1, 0
      %v672 = vsel %vm668, 1, 0
      %v673 = vsel %vm669, 1, 0
      %v674 = vcvt.s32.f32 %v670
      %v675 = vcvt.s32.f32 %v671
      %v676 = vcvt.s32.f32 %v672
      %v677 = vcvt.s32.f32 %v673
      %v678 = vadd.f32 %v674, %v675
      %679 = vadd.xlane.f32.xlu0 %v678
      %v680 = vpop.xlane.xlu0 %679
      %v681 = vadd.f32 %v676, %v677
      %682 = vadd.xlane.f32.xlu0 %v681
      %v683 = vpop.xlane.xlu0 %682
      %v684 = vmul.f32 %v680, %v146
      %v685 = vmul.f32 %v683, %v147
      %v686 = vadd.f32 %v684, %v685
      %v687 = vrot.slane %v686, 4
      %v688 = vadd.f32 %v686, %v687
      %v689 = vrot.slane %v688, 2
      %v690 = vadd.f32 %v688, %v689
      %v691 = vrot.slane %v690, 1
      %v692 = vadd.f32 %v690, %v691
      %v693 = vadd.f32 %v621, %v692
      %v694 = vmax.f32 %v429, %v432
      %v695 = vrot.slane %v694, 4
      %v696 = vmax.f32 %v694, %v695
      %v697 = vrot.slane %v696, 2
      %v698 = vmax.f32 %v696, %v697
      %v699 = vrot.slane %v698, 1
      %v700 = vmax.f32 %v698, %v699
      %v701 = vmax.f32 %v470, %v473
      %v702 = vrot.slane %v701, 4
      %v703 = vmax.f32 %v701, %v702
      %v704 = vrot.slane %v703, 2
      %v705 = vmax.f32 %v703, %v704
      %v706 = vrot.slane %v705, 1
      %v707 = vmax.f32 %v705, %v706
      %vm708 = vcmp.eq.f32.partialorder %v429, %v700
      %vm709 = vcmp.eq.f32.partialorder %v470, %v707
      %vm710 = vcmp.eq.f32.partialorder %v432, %v700
      %vm711 = vcmp.eq.f32.partialorder %v473, %v707
      %v712 = vsel %vm708, %v476, 16
      %v713 = vsel %vm709, %v476, 16
      %v714 = vsel %vm710, %v477, 16
      %v715 = vsel %vm711, %v477, 16
      %vm716 = vcmp.lt.s32.totalorder %v712, %v714
      %v717 = vsel %vm716, %v712, %v714
      %v718 = vrot.slane %v717, 4
      %vm719 = vcmp.lt.s32.totalorder %v717, %v718
      %v720 = vsel %vm719, %v717, %v718
      %v721 = vrot.slane %v720, 2
      %vm722 = vcmp.lt.s32.totalorder %v720, %v721
      %v723 = vsel %vm722, %v720, %v721
      %v724 = vrot.slane %v723, 1
      %vm725 = vcmp.lt.s32.totalorder %v723, %v724
      %v726 = vsel %vm725, %v723, %v724
      %vm727 = vcmp.lt.s32.totalorder %v713, %v715
      %v728 = vsel %vm727, %v713, %v715
      %v729 = vrot.slane %v728, 4
      %vm730 = vcmp.lt.s32.totalorder %v728, %v729
      %v731 = vsel %vm730, %v728, %v729
      %v732 = vrot.slane %v731, 2
      %vm733 = vcmp.lt.s32.totalorder %v731, %v732
      %v734 = vsel %vm733, %v731, %v732
      %v735 = vrot.slane %v734, 1
      %vm736 = vcmp.lt.s32.totalorder %v734, %v735
      %v737 = vsel %vm736, %v734, %v735
      %vm738 = vcmp.eq.s32.totalorder %v476, %v726
      %vm739 = vcmp.eq.s32.totalorder %v476, %v737
      %vm740 = vcmp.eq.s32.totalorder %v477, %v726
      %vm741 = vcmp.eq.s32.totalorder %v477, %v737
      %v742 = vsel %vm738, 1, 0
      %v743 = vsel %vm739, 1, 0
      %v744 = vsel %vm740, 1, 0
      %v745 = vsel %vm741, 1, 0
      %v746 = vcvt.s32.f32 %v742
      %v747 = vcvt.s32.f32 %v743
      %v748 = vcvt.s32.f32 %v744
      %v749 = vcvt.s32.f32 %v745
      %v750 = vadd.f32 %v746, %v747
      %751 = vadd.xlane.f32.xlu0 %v750
      %v752 = vpop.xlane.xlu0 %751
      %v753 = vadd.f32 %v748, %v749
      %754 = vadd.xlane.f32.xlu0 %v753
      %v755 = vpop.xlane.xlu0 %754
      %v756 = vmul.f32 %v752, %v148
      %v757 = vmul.f32 %v755, %v149
      %v758 = vadd.f32 %v756, %v757
      %v759 = vrot.slane %v758, 4
      %v760 = vadd.f32 %v758, %v759
      %v761 = vrot.slane %v760, 2
      %v762 = vadd.f32 %v760, %v761
      %v763 = vrot.slane %v762, 1
      %v764 = vadd.f32 %v762, %v763
      %v765 = vadd.f32 %v693, %v764
      %766 = vst [vmem:[%s141] sm:$0xff] %v765
      %p767 = scmp.lt.s32.totalorder %s13, 1
      %s768 = scalar_select %p767, %s13, 1
      %s769 = smul.addr %s768, 8
      %s770 = scalar_lea.vmem %s2, %s769
      // Predicated region
      $region29: #{backbone_eval_forward.1} parent=27 // pred_check
        %p771 = pneg %p78
      $region30: #{backbone_eval_forward.1} parent=27 // pred_check_branch
        %773 = sbr.rel (%p771) target = $region32
      $region31: #{backbone_eval_forward.1} parent=27 // pred_region
        _
      $region32: #{backbone_eval_forward.1} parent=27 // pred_fallthru
        _
    $region28: #{backbone_eval_forward.1} parent=5 // pred_fallthru
      _
    %p774 = scmp.le.s32.totalorder 2, %s8
    // Predicated region
    $region33: #{backbone_eval_forward.1} parent=5 // pred_check
      %p775 = pneg %p774
    $region34: #{backbone_eval_forward.1} parent=5 // pred_check_branch
      %777 = sbr.rel (%p775) target = $region36
    $region35: #{backbone_eval_forward.1} parent=5 // pred_region
      %s778 = ssub.s32 %s8, 2
      // Predicated region
      $region37: #{backbone_eval_forward.1} parent=35 // pred_check
        %p779 = pneg %p84
      $region38: #{backbone_eval_forward.1} parent=35 // pred_check_branch
        %781 = sbr.rel (%p779) target = $region40
      $region39: #{backbone_eval_forward.1} parent=35 // pred_region
        %p782 = scmp.lt.s32.totalorder %s14, 1
        %s783 = scalar_select %p782, %s14, 1
        %s784 = smul.addr %s783, 8
        %s785 = scalar_lea.vmem %s2, %s784
      $region40: #{backbone_eval_forward.1} parent=35 // pred_fallthru
        _
    $region36: #{backbone_eval_forward.1} parent=5 // pred_fallthru
      _
  $region6: #{backbone_eval_forward.1} parent=0 // loop_footer
    %s12 = sadd.s32 1, %s8
  $region7: #{backbone_eval_forward.1} parent=0 // loop_footer_branch
    %7 = sbr.rel target = $region3
  $region8: #{backbone_eval_forward.1} parent=0 // loop_exit
    _

</llo_original>
